<compile_context>
chip_gen: v7x
topology: tpu7x:2x2x1
jax: 0.10.0
libtpu: 0.0.40
codegen_flags: <defaults>
</compile_context>

<pallas_src>
import jax
import jax.numpy as jnp
from jax.experimental import pallas as pl
from jax.experimental.pallas import tpu as pltpu

_LOG_CLAMP = -100.0  # PyTorch F.binary_cross_entropy clamps log terms at -100.


def _cdiv(a, b):
    return -(-a // b)


def _round_up(a, b):
    return _cdiv(a, b) * b


def _vmem_capacity_bytes():
    """Per-generation VMEM capacity; conservative fallback if the query fails."""
    try:
        cap = int(getattr(pltpu.get_tpu_info(), "vmem_capacity_bytes"))
        if cap > 0:
            return cap
    except Exception:
        pass
    return 64 << 20  # v7x per-TensorCore VMEM (smallest of the three generations)


def _padded_row_bytes(cols, itemsize):
    """VMEM is (8,128)-tiled: a row of `cols` elements occupies ceil(cols/128)*128 lanes."""
    return _round_up(max(cols, 1), 128) * int(itemsize)


def _bce_mean_mask(x, y, valid):
    """f32 BCE + channel mean (sum * 1/C) + valid mask.  x, y: (TB, C); valid: (TB, 1)."""
    log_x = jnp.maximum(jnp.log(x), _LOG_CLAMP)
    log_1mx = jnp.maximum(jnp.log(1.0 - x), _LOG_CLAMP)
    bce = -(y * log_x + (1.0 - y) * log_1mx)                      # (TB, C)
    inv_c = 1.0 / x.shape[1]
    return jnp.sum(bce, axis=1, keepdims=True) * (valid * inv_c)  # (TB, 1)


def _full_kernel(out_ref, gt_ref, valid_ref, loss_ref):
    """Gridless path: whole problem in one VMEM block (native (B, C) layout)."""
    loss_ref[...] = _bce_mean_mask(
        out_ref[...].astype(jnp.float32),
        gt_ref[...].astype(jnp.float32),
        valid_ref[...].astype(jnp.float32),
    )


def _make_tiled_kernel(batch, tile_b, mask_tail):
    """Tiled path: one (tile_b, C) batch tile per grid step."""

    def kernel(out_ref, gt_ref, valid_ref, loss_ref):
        loss = _bce_mean_mask(
            out_ref[...].astype(jnp.float32),
            gt_ref[...].astype(jnp.float32),
            valid_ref[...].astype(jnp.float32),
        )
        if mask_tail:
            # Last block overruns B: out-of-bounds rows read garbage (possibly NaN) and
            # their writes are dropped by Pallas anyway; zero them so the (B, 1) output
            # stays clean even if someone later reduces over it.
            row = tile_b * pl.program_id(0) + jax.lax.broadcasted_iota(
                jnp.int32, loss.shape, 0)
            loss = jnp.where(row < batch, loss, 0.0)
        loss_ref[...] = loss

    return kernel


def hand_type_loss(hand_type_out, hand_type_gt, hand_type_valid, *, force_grid=False):
    """Pallas implementation of HandTypeLoss.forward.

    Args:
      hand_type_out:   (B, C) float probabilities.
      hand_type_gt:    (B, C) float targets.
      hand_type_valid: (B,)   float validity mask.
      force_grid:      skip the gridless path (testing / very large B).
    Returns:
      (B,) float32 per-sample loss.
    """
    B, C = hand_type_out.shape
    assert hand_type_gt.shape == (B, C)
    assert hand_type_valid.shape[0] == B

    # Free bitcast: keeps batch on the sublane axis so it matches the loss layout.
    valid_2d = hand_type_valid.reshape(B, 1)

    out_item = jnp.dtype(hand_type_out.dtype).itemsize
    gt_item = jnp.dtype(hand_type_gt.dtype).itemsize
    valid_item = jnp.dtype(valid_2d.dtype).itemsize

    # Lane-padded VMEM bytes per batch row (one buffer of each operand).
    row_bytes = (_padded_row_bytes(C, out_item) + _padded_row_bytes(C, gt_item)
                 + _padded_row_bytes(1, valid_item) + _padded_row_bytes(1, 4))

    vmem_cap = _vmem_capacity_bytes()

    cost = pl.CostEstimate(
        flops=6 * B * C,
        transcendentals=2 * B * C,  # two jnp.log per element (EUP)
        bytes_accessed=B * C * (out_item + gt_item) + B * valid_item + B * 4,
    )

    resident = B * row_bytes
    if not force_grid and resident <= vmem_cap // 4:
        # Gridless: one full-array block, no pipeline prologue/epilogue, no index maps.
        loss = pl.pallas_call(
            _full_kernel,
            out_shape=jax.ShapeDtypeStruct((B, 1), jnp.float32),
            in_specs=[
                pl.BlockSpec(memory_space=pltpu.MemorySpace.VMEM),
                pl.BlockSpec(memory_space=pltpu.MemorySpace.VMEM),
                pl.BlockSpec(memory_space=pltpu.MemorySpace.VMEM),
            ],
            out_specs=pl.BlockSpec(memory_space=pltpu.MemorySpace.VMEM),
            compiler_params=pltpu.CompilerParams(
                vmem_limit_bytes=min(int(vmem_cap * 0.9),
                                     max(resident + (2 << 20), 32 << 20)),
            ),
            cost_estimate=cost,
        )(hand_type_out, hand_type_gt, valid_2d)
        return loss.reshape(B)

    # Tiled path: stream (tile_b, C) batch tiles in the native layout (no transposes,
    # no pads).  Tile size from the double-buffered, lane-padded VMEM footprint.
    budget = max(vmem_cap // 6, 4 << 20)
    tile_b = max(8, min(budget // (2 * row_bytes), 8192))
    # Guarantee >= 2 blocks so the "parallel" axis can occupy both v7x TensorCores.
    tile_b = min(tile_b, _round_up(_cdiv(B, 2), 8))
    tile_b = max(8, (tile_b // 8) * 8)
    num_blocks = _cdiv(B, tile_b)
    mask_tail = (B % tile_b) != 0

    loss = pl.pallas_call(
        _make_tiled_kernel(B, tile_b, mask_tail),
        out_shape=jax.ShapeDtypeStruct((B, 1), jnp.float32),
        grid=(num_blocks,),
        in_specs=[
            pl.BlockSpec((tile_b, C), lambda i: (i, 0)),
            pl.BlockSpec((tile_b, C), lambda i: (i, 0)),
            pl.BlockSpec((tile_b, 1), lambda i: (i, 0)),
        ],
        out_specs=pl.BlockSpec((tile_b, 1), lambda i: (i, 0)),
        compiler_params=pltpu.CompilerParams(
            # "parallel": shards batch tiles across v7x's two TensorCores; on
            # single-core v5e/v6e the grid is a serial loop, so the tile is kept large.
            dimension_semantics=("parallel",),
            vmem_limit_bytes=min(int(vmem_cap * 0.9),
                                 2 * row_bytes * tile_b + (4 << 20)),
        ),
        cost_estimate=cost,
    )(hand_type_out, hand_type_gt, valid_2d)
    return loss.reshape(B)


def _reference(out, gt, valid):
    x = out.astype(jnp.float32)
    y = gt.astype(jnp.float32)
    log_x = jnp.maximum(jnp.log(x), _LOG_CLAMP)
    log_1mx = jnp.maximum(jnp.log(1.0 - x), _LOG_CLAMP)
    bce = -(y * log_x + (1.0 - y) * log_1mx)
    return bce.mean(axis=1) * valid.astype(jnp.float32)


if __name__ == "__main__":
    key = jax.random.PRNGKey(0)
    k1, k2, k3, k4, k5, k6 = jax.random.split(key, 6)

    # InterHand-style shapes: 2 hand-type classes, small batch -> gridless path.
    B, C = 8, 2
    out_s = jax.nn.sigmoid(jax.random.normal(k1, (B, C), dtype=jnp.float32))
    gt_s = jax.random.bernoulli(k2, p=0.5, shape=(B, C)).astype(jnp.float32)
    valid_s = jax.random.bernoulli(k3, p=0.75, shape=(B,)).astype(jnp.float32)

    loss_s = jax.block_until_ready(hand_type_loss(out_s, gt_s, valid_s))
    ref_s = _reference(out_s, gt_s, valid_s)
    assert loss_s.shape == (B,)
    assert jnp.allclose(loss_s, ref_s, rtol=1e-5, atol=1e-5), (loss_s, ref_s)

    # Force the tiled path at a small size: 2 batch tiles + an uneven tail exercises
    # the grid, the two-block (v7x) clamp and the in-kernel tail mask.
    B2, C2 = 300, 2
    out_l = jax.nn.sigmoid(jax.random.normal(k4, (B2, C2), dtype=jnp.float32))
    gt_l = jax.random.bernoulli(k5, p=0.5, shape=(B2, C2)).astype(jnp.float32)
    valid_l = jax.random.bernoulli(k6, p=0.75, shape=(B2,)).astype(jnp.float32)

    loss_l = jax.block_until_ready(hand_type_loss(out_l, gt_l, valid_l, force_grid=True))
    ref_l = _reference(out_l, gt_l, valid_l)
    assert loss_l.shape == (B2,)
    assert jnp.allclose(loss_l, ref_l, rtol=1e-5, atol=1e-5), (loss_l, ref_l)

    print("KERNEL_OK")
</pallas_src>

<mosaic_0001>
module attributes {stable_mosaic.version = 11 : i64} {
  func.func @_full_kernel(%arg0: memref<8x2xf32, #tpu.memory_space<vmem>>, %arg1: memref<8x2xf32, #tpu.memory_space<vmem>>, %arg2: memref<8x1xf32, #tpu.memory_space<vmem>>, %arg3: memref<8x1xf32, #tpu.memory_space<vmem>>) attributes {dimension_semantics = [], scalar_prefetch = 0 : i64, scratch_operands = 0 : i64, tpu.core_type = #tpu.core_type<tc>} {
    %c0 = arith.constant 0 : index
    %c0_0 = arith.constant 0 : index
    %0 = vector.load %arg0[%c0, %c0_0] : memref<8x2xf32, #tpu.memory_space<vmem>>, vector<8x2xf32>
    %c0_1 = arith.constant 0 : index
    %c0_2 = arith.constant 0 : index
    %1 = vector.load %arg1[%c0_1, %c0_2] : memref<8x2xf32, #tpu.memory_space<vmem>>, vector<8x2xf32>
    %c0_3 = arith.constant 0 : index
    %c0_4 = arith.constant 0 : index
    %2 = vector.load %arg2[%c0_3, %c0_4] : memref<8x1xf32, #tpu.memory_space<vmem>>, vector<8x1xf32>
    %3 = math.log %0 : vector<8x2xf32>
    %cst = arith.constant -1.000000e+02 : f32
    %4 = vector.broadcast %cst : f32 to vector<8x2xf32>
    %5 = arith.maximumf %3, %4 : vector<8x2xf32>
    %cst_5 = arith.constant 1.000000e+00 : f32
    %6 = vector.broadcast %cst_5 : f32 to vector<8x2xf32>
    %7 = arith.subf %6, %0 : vector<8x2xf32>
    %8 = math.log %7 : vector<8x2xf32>
    %cst_6 = arith.constant -1.000000e+02 : f32
    %9 = vector.broadcast %cst_6 : f32 to vector<8x2xf32>
    %10 = arith.maximumf %8, %9 : vector<8x2xf32>
    %11 = arith.mulf %1, %5 : vector<8x2xf32>
    %cst_7 = arith.constant 1.000000e+00 : f32
    %12 = vector.broadcast %cst_7 : f32 to vector<8x2xf32>
    %13 = arith.subf %12, %1 : vector<8x2xf32>
    %14 = arith.mulf %13, %10 : vector<8x2xf32>
    %15 = arith.addf %11, %14 : vector<8x2xf32>
    %cst_8 = arith.constant 0.000000e+00 : f32
    %16 = vector.broadcast %cst_8 : f32 to vector<8x2xf32>
    %17 = arith.subf %16, %15 : vector<8x2xf32>
    %cst_9 = arith.constant dense<0.000000e+00> : vector<8xf32>
    %18 = vector.multi_reduction <add>, %17, %cst_9 [1] : vector<8x2xf32> to vector<8xf32>
    %19 = vector.shape_cast %18 : vector<8xf32> to vector<8x1xf32>
    %cst_10 = arith.constant 5.000000e-01 : f32
    %20 = vector.broadcast %cst_10 : f32 to vector<8x1xf32>
    %21 = arith.mulf %2, %20 : vector<8x1xf32>
    %22 = arith.mulf %19, %21 : vector<8x1xf32>
    %c0_11 = arith.constant 0 : index
    %c0_12 = arith.constant 0 : index
    %23 = vector.load %arg3[%c0_11, %c0_12] : memref<8x1xf32, #tpu.memory_space<vmem>>, vector<8x1xf32>
    tpu.vector_store %arg3[%c0_11, %c0_12], %22 {strides = array<i32>} : memref<8x1xf32, #tpu.memory_space<vmem>>, vector<8x1xf32>,
    return
  }
}

</mosaic_0001>

<llo_original>
// kernel: tpu_custom_call.1
$region0: #{tpu_custom_call.1}
  #allocation0 [shape = 'u32[]', space=smem, size = 0x4, offset = 0x4, fixed_abs, tag = 'smem constant byte address 0x4 - core index']
  #allocation1 [shape = 'u32[144,128]{1,0:T(1,128)}', space=vmem, size = 0x12000, scoped, tag = 'internal scratch']
  %s0 = inlined_call_operand.vmem [shape: f32[8,2], index: 0, kind: input, shape index: {}]
  %s1 = inlined_call_operand.vmem [shape: f32[8,2], index: 1, kind: input, shape index: {}]
  %s2 = inlined_call_operand.vmem [shape: f32[8,1], index: 2, kind: input, shape index: {}]
  %s3 = inlined_call_operand.vmem [shape: f32[8,1], index: 3, kind: output, shape index: {}]
  %s4 = sld [smem:[#allocation0]]
  $region22: #{tpu_custom_call.1} parent=0
    _
  %s6 = ssub.s32 1, %s4
  %s7 = scalar_select 0, %s6, %s4
  // Predicated region
  $region2: #{tpu_custom_call.1} parent=0 // pred_check
    _
  $region3: #{tpu_custom_call.1} parent=0 // pred_check_branch
    %9 = sbr.rel (0) target = $region5
  $region4: #{tpu_custom_call.1} parent=0 // pred_region
    _
  $region5: #{tpu_custom_call.1} parent=0 // pred_fallthru
    _
  // Predicated region
  $region6: #{tpu_custom_call.1} parent=0 // pred_check
    _
  $region7: #{tpu_custom_call.1} parent=0 // pred_check_branch
    %11 = sbr.rel (0) target = $region9
  $region8: #{tpu_custom_call.1} parent=0 // pred_region
    _
  $region9: #{tpu_custom_call.1} parent=0 // pred_fallthru
    _
  // Predicated region
  $region10: #{tpu_custom_call.1} parent=0 // pred_check
    _
  $region11: #{tpu_custom_call.1} parent=0 // pred_check_branch
    %13 = sbr.rel (0) target = $region13
  $region12: #{tpu_custom_call.1} parent=0 // pred_region
    _
  $region13: #{tpu_custom_call.1} parent=0 // pred_fallthru
    _
  %v14 = vld [vmem:[%s0] sm:$0xff]
  %v15 = vld [vmem:[%s1] sm:$0xff]
  %v16 = vld [vmem:[%s2] sm:$0xff]
  %v17 = vlog2.pop %v14
  %v18 = vmul.f32 %v17, 0.6931472
  %v19 = vmax.f32 %v18, -100.0
  %v20 = vsub.f32 1.0, %v14
  %v21 = vlog2.pop %v20
  %v22 = vmul.f32 %v21, 0.6931472
  %v23 = vmax.f32 %v22, -100.0
  %v24 = vmul.f32 %v15, %v19
  %v25 = vsub.f32 1.0, %v15
  %v26 = vmul.f32 %v25, %v23
  %v27 = vadd.f32 %v24, %v26
  %v28 = vsub.f32 0.0, %v27
  %vm29 = vcmask 15360
  %v30 = vsel %vm29, %v28, 0.0
  %31 = vadd.xlane.f32.xlu0 %v30
  %v32 = vpop.xlane.xlu0 %31
  %v33 = vmul.f32 %v16, 0.5
  %v34 = vmul.f32 %v32, %v33
  %vm35 = vcmask 7168
  %36 = vst.msk [vmem:[%s3] sm:$0xff] %vm35, %v34
  // Predicated region
  $region14: #{tpu_custom_call.1} parent=0 // pred_check
    _
  $region15: #{tpu_custom_call.1} parent=0 // pred_check_branch
    %38 = sbr.rel (0) target = $region17
  $region16: #{tpu_custom_call.1} parent=0 // pred_region
    _
  $region17: #{tpu_custom_call.1} parent=0 // pred_fallthru
    _
  // Predicated region
  $region18: #{tpu_custom_call.1} parent=0 // pred_check
    _
  $region19: #{tpu_custom_call.1} parent=0 // pred_check_branch
    %40 = sbr.rel (0) target = $region21
  $region20: #{tpu_custom_call.1} parent=0 // pred_region
    _
  $region21: #{tpu_custom_call.1} parent=0 // pred_fallthru
    _

</llo_original>
